<compile_context>
chip_gen: v7x
topology: tpu7x:2x2x1
jax: 0.10.0
libtpu: 0.0.40
codegen_flags: <defaults>
</compile_context>

<pallas_src>
import functools

import jax
import jax.numpy as jnp
from jax.experimental import pallas as pl
from jax.experimental.pallas import tpu as pltpu


def _grad_loss_kernel(p_ref, t_ref, mx_ref, my_ref, out_ref, *,
                      W: int, L: int, B: int, NC: int,
                      ragged: bool, use_roll: bool):
    """One (B, L) slab of flattened images -> per-block |grad diff| partial sums."""
    d = p_ref[...].astype(jnp.float32) - t_ref[...].astype(jnp.float32)   # (B, L)

    if ragged:
        # Zero rows past NC in the overhanging last block before any arithmetic,
        # so unspecified (possibly NaN) values cannot leak into the sums.
        rows = jax.lax.broadcasted_iota(jnp.int32, (B, 1), 0) + pl.program_id(0) * B
        d = jnp.where(rows < NC, d, 0.0)

    if use_roll:
        # Lane rotations reuse d in place instead of materializing odd-width
        # (B, L-1)/(B, L-W) lane-misaligned temporaries.
        # pltpu.roll follows jnp.roll semantics: roll(d, L-W, 1)[k] == d[(k+W) % L].
        dx = pltpu.roll(d, shift=L - W, axis=1) - d        # d[k+W] - d[k] (wraps)
        sum_x = jnp.sum(jnp.abs(dx) * mx_ref[...])         # mask kills the W wrap cols
        dy = pltpu.roll(d, shift=L - 1, axis=1) - d        # d[k+1] - d[k] (wraps)
        sum_y = jnp.sum(jnp.abs(dy) * my_ref[...])         # mask kills row-end cols
    else:
        # Fallback when the flattened row length is not a multiple of 128 lanes.
        sum_x = jnp.sum(jnp.abs(d[:, W:] - d[:, :-W]))
        sum_y = jnp.sum(jnp.abs((d[:, 1:] - d[:, :-1]) * my_ref[...][:, : L - 1]))

    # Lane-dense (8, 128) tiles via plain scalar splats + unmasked stores.
    out_ref[0, 0] = jnp.broadcast_to(sum_x, (8, 128))
    out_ref[0, 1] = jnp.broadcast_to(sum_y, (8, 128))


def _vmem_capacity_bytes() -> int:
    try:
        info = pltpu.get_tpu_info()
        cap = getattr(info, "vmem_capacity_bytes", None)
        if cap:
            return int(cap)
    except Exception:
        pass
    return 64 * 1024 * 1024  # conservative default (v7x physical VMEM per core)


def gradient_loss(predict, target):
    """Pallas implementation of GradientLoss.forward (scalar f32 output)."""
    assert predict.shape == target.shape
    N, C, H, W = predict.shape
    NC, L = N * C, H * W
    itemsize = jnp.dtype(predict.dtype).itemsize

    # Free contiguous views, native dtype (no wrapper-side copies / padding).
    p = predict.reshape(NC, L)
    t = target.reshape(NC, L)

    # --- block sizing -------------------------------------------------------
    # Per-row VMEM footprint: 2 inputs x 2 pipeline buffers x itemsize plus
    # ~3 live f32 temporaries (d, rolled, masked-abs) inside the kernel.
    vmem_limit = _vmem_capacity_bytes() // 2           # ~= default scoped limit
    bytes_per_row = L * (4 * itemsize + 3 * 4)
    block_budget = (vmem_limit * 3) // 4                # pipeline headroom
    max_rows = max(8, (block_budget // bytes_per_row) // 8 * 8)
    # TODO(synk): if a single 8-row slab exceeds the VMEM budget (huge H*W),
    # L-tiling with a W-element halo for the H-direction diff would be needed.

    # Ensure >= 2 blocks once the input is non-trivial so the "parallel" grid
    # axis shards across both TensorCores on v7x, while keeping >= ~2 MiB
    # per-input blocks so grid-step overhead stays negligible on v5e/v6e.
    want_split = (NC * L * itemsize >= (4 << 20)) and NC >= 16

    if NC <= max_rows and not want_split:
        B = NC                                          # full NC axis, one block
    else:
        B = min(NC, max_rows)
        if want_split:
            half = -(-NC // 2)
            B = min(B, -(-half // 8) * 8)
        B = max(8, (B // 8) * 8)                        # (8, 128) sublane rule
    G = -(-NC // B)
    ragged = (NC % B) != 0                              # handled in-kernel, no jnp.pad
    use_roll = (L % 128 == 0)

    # Resident (1, L) wrap masks (constant index_map -> one DMA, reused).
    idx = jnp.arange(L, dtype=jnp.int32)
    mask_x = (idx < (L - W)).astype(jnp.float32).reshape(1, L)
    mask_y = ((idx % W) != (W - 1)).astype(jnp.float32).reshape(1, L)

    kernel = functools.partial(_grad_loss_kernel, W=W, L=L, B=B, NC=NC,
                               ragged=ragged, use_roll=use_roll)

    partials = pl.pallas_call(
        kernel,
        out_shape=jax.ShapeDtypeStruct((G, 2, 8, 128), jnp.float32),
        grid=(G,),
        in_specs=[
            pl.BlockSpec((B, L), lambda i: (i, 0)),
            pl.BlockSpec((B, L), lambda i: (i, 0)),
            pl.BlockSpec((1, L), lambda i: (0, 0)),
            pl.BlockSpec((1, L), lambda i: (0, 0)),
        ],
        out_specs=pl.BlockSpec((1, 2, 8, 128), lambda i: (i, 0, 0, 0)),
        compiler_params=pltpu.CompilerParams(
            dimension_semantics=("parallel",),          # independent blocks -> both TCs
            vmem_limit_bytes=int(vmem_limit),
        ),
        cost_estimate=pl.CostEstimate(
            flops=8 * NC * L,
            transcendentals=0,
            bytes_accessed=2 * NC * L * itemsize + 2 * L * 4 + G * 2 * 8 * 128 * 4,
        ),
    )(p, t, mask_x, mask_y)

    sum_x = jnp.sum(partials[:, 0, 0, 0])
    sum_y = jnp.sum(partials[:, 1, 0, 0])

    # nn.L1Loss 'mean' denominators.  H == 1 or W == 1 gives 0/0 = nan, matching
    # torch.nn.L1Loss applied to an empty gradient tensor.
    n_x = NC * (H - 1) * W
    n_y = NC * H * (W - 1)
    return sum_x / jnp.float32(n_x) + sum_y / jnp.float32(n_y)


def _gradient_loss_ref(predict, target):
    # Pure-JAX reference for correctness checking.
    px = predict[..., 1:, :] - predict[..., :-1, :]
    py = predict[..., 1:] - predict[..., :-1]
    tx = target[..., 1:, :] - target[..., :-1, :]
    ty = target[..., 1:] - target[..., :-1]
    return jnp.mean(jnp.abs(px - tx)) + jnp.mean(jnp.abs(py - ty))


if __name__ == "__main__":
    key = jax.random.PRNGKey(0)
    k1, k2 = jax.random.split(key)
    N, C, H, W = 2, 4, 16, 16
    predict = jax.random.normal(k1, (N, C, H, W), dtype=jnp.float32)
    target = jax.random.normal(k2, (N, C, H, W), dtype=jnp.float32)

    out = jax.block_until_ready(gradient_loss(predict, target))
    ref = jax.block_until_ready(_gradient_loss_ref(predict, target))

    assert jnp.allclose(out, ref, rtol=1e-5, atol=1e-5), (out, ref)
    print("KERNEL_OK")
</pallas_src>

<mosaic_0001>
module attributes {stable_mosaic.version = 11 : i64} {
  func.func @_grad_loss_kernel(%arg0: i32, %arg1: memref<8x256xf32, #tpu.memory_space<vmem>>, %arg2: memref<8x256xf32, #tpu.memory_space<vmem>>, %arg3: memref<1x256xf32, #tpu.memory_space<vmem>>, %arg4: memref<1x256xf32, #tpu.memory_space<vmem>>, %arg5: memref<1x2x8x128xf32, #tpu.memory_space<vmem>>) attributes {dimension_semantics = [#tpu.dimension_semantics<parallel>], iteration_bounds = array<i64: 1>, scalar_prefetch = 0 : i64, scratch_operands = 0 : i64, tpu.core_type = #tpu.core_type<tc>, window_params = [{transform_indices = @transform_0, window_bounds = array<i64: 8, 256>}, {transform_indices = @transform_1, window_bounds = array<i64: 8, 256>}, {pipeline_mode = #tpu.pipeline_mode<synchronous>, transform_indices = @transform_2, window_bounds = array<i64: 1, 256>}, {pipeline_mode = #tpu.pipeline_mode<synchronous>, transform_indices = @transform_3, window_bounds = array<i64: 1, 256>}, {transform_indices = @transform_4, window_bounds = array<i64: 1, 2, 8, 128>}]} {
    %c0 = arith.constant 0 : index
    %c0_0 = arith.constant 0 : index
    %0 = vector.load %arg1[%c0, %c0_0] : memref<8x256xf32, #tpu.memory_space<vmem>>, vector<8x256xf32>
    %c0_1 = arith.constant 0 : index
    %c0_2 = arith.constant 0 : index
    %1 = vector.load %arg2[%c0_1, %c0_2] : memref<8x256xf32, #tpu.memory_space<vmem>>, vector<8x256xf32>
    %2 = arith.subf %0, %1 : vector<8x256xf32>
    %c240_i32 = arith.constant 240 : i32
    %3 = tpu.dynamic_rotate %2 by %c240_i32 dim 1 : vector<8x256xf32>, i32 -> vector<8x256xf32>
    %4 = arith.subf %3, %2 : vector<8x256xf32>
    %5 = math.absf %4 : vector<8x256xf32>
    %c0_3 = arith.constant 0 : index
    %c0_4 = arith.constant 0 : index
    %6 = vector.load %arg3[%c0_3, %c0_4] : memref<1x256xf32, #tpu.memory_space<vmem>>, vector<1x256xf32>
    %7 = vector.broadcast %6 : vector<1x256xf32> to vector<8x256xf32>
    %8 = arith.mulf %5, %7 : vector<8x256xf32>
    %9 = vector.shape_cast %8 : vector<8x256xf32> to vector<1x8x256xf32>
    %cst = arith.constant dense<0.000000e+00> : vector<1xf32>
    %10 = vector.multi_reduction <add>, %9, %cst [1, 2] : vector<1x8x256xf32> to vector<1xf32>
    %11 = vector.shape_cast %10 : vector<1xf32> to vector<1x1x1xf32>
    %12 = vector.extract %11[0, 0, 0] : f32 from vector<1x1x1xf32>
    %c255_i32 = arith.constant 255 : i32
    %13 = tpu.dynamic_rotate %2 by %c255_i32 dim 1 : vector<8x256xf32>, i32 -> vector<8x256xf32>
    %14 = arith.subf %13, %2 : vector<8x256xf32>
    %15 = math.absf %14 : vector<8x256xf32>
    %c0_5 = arith.constant 0 : index
    %c0_6 = arith.constant 0 : index
    %16 = vector.load %arg4[%c0_5, %c0_6] : memref<1x256xf32, #tpu.memory_space<vmem>>, vector<1x256xf32>
    %17 = vector.broadcast %16 : vector<1x256xf32> to vector<8x256xf32>
    %18 = arith.mulf %15, %17 : vector<8x256xf32>
    %19 = vector.shape_cast %18 : vector<8x256xf32> to vector<1x8x256xf32>
    %cst_7 = arith.constant dense<0.000000e+00> : vector<1xf32>
    %20 = vector.multi_reduction <add>, %19, %cst_7 [1, 2] : vector<1x8x256xf32> to vector<1xf32>
    %21 = vector.shape_cast %20 : vector<1xf32> to vector<1x1x1xf32>
    %22 = vector.extract %21[0, 0, 0] : f32 from vector<1x1x1xf32>
    %23 = vector.broadcast %12 : f32 to vector<8x128xf32>
    %c0_8 = arith.constant 0 : index
    %c0_9 = arith.constant 0 : index
    %c0_10 = arith.constant 0 : index
    %c0_11 = arith.constant 0 : index
    %24 = vector.load %arg5[%c0_8, %c0_9, %c0_10, %c0_11] : memref<1x2x8x128xf32, #tpu.memory_space<vmem>>, vector<1x1x8x128xf32>
    %25 = vector.shape_cast %24 : vector<1x1x8x128xf32> to vector<8x128xf32>
    %26 = vector.shape_cast %23 : vector<8x128xf32> to vector<1x1x8x128xf32>
    tpu.vector_store %arg5[%c0_8, %c0_9, %c0_10, %c0_11], %26 {strides = array<i32>} : memref<1x2x8x128xf32, #tpu.memory_space<vmem>>, vector<1x1x8x128xf32>,
    %27 = vector.broadcast %22 : f32 to vector<8x128xf32>
    %c0_12 = arith.constant 0 : index
    %c1 = arith.constant 1 : index
    %c0_13 = arith.constant 0 : index
    %c0_14 = arith.constant 0 : index
    %28 = vector.load %arg5[%c0_12, %c1, %c0_13, %c0_14] : memref<1x2x8x128xf32, #tpu.memory_space<vmem>>, vector<1x1x8x128xf32>
    %29 = vector.shape_cast %28 : vector<1x1x8x128xf32> to vector<8x128xf32>
    %30 = vector.shape_cast %27 : vector<8x128xf32> to vector<1x1x8x128xf32>
    tpu.vector_store %arg5[%c0_12, %c1, %c0_13, %c0_14], %30 {strides = array<i32>} : memref<1x2x8x128xf32, #tpu.memory_space<vmem>>, vector<1x1x8x128xf32>,
    return
  }
  func.func @transform_0(%arg0: i32) -> (i32, i32) {
    %c0_i32 = arith.constant 0 : i32
    %c0_i32_0 = arith.constant 0 : i32
    return %arg0, %c0_i32 : i32, i32
  }
  func.func @transform_1(%arg0: i32) -> (i32, i32) {
    %c0_i32 = arith.constant 0 : i32
    %c0_i32_0 = arith.constant 0 : i32
    return %arg0, %c0_i32 : i32, i32
  }
  func.func @transform_2(%arg0: i32) -> (i32, i32) {
    %c0_i32 = arith.constant 0 : i32
    %c0_i32_0 = arith.constant 0 : i32
    %c0_i32_1 = arith.constant 0 : i32
    return %c0_i32, %c0_i32_0 : i32, i32
  }
  func.func @transform_3(%arg0: i32) -> (i32, i32) {
    %c0_i32 = arith.constant 0 : i32
    %c0_i32_0 = arith.constant 0 : i32
    %c0_i32_1 = arith.constant 0 : i32
    return %c0_i32, %c0_i32_0 : i32, i32
  }
  func.func @transform_4(%arg0: i32) -> (i32, i32, i32, i32) {
    %c0_i32 = arith.constant 0 : i32
    %c0_i32_0 = arith.constant 0 : i32
    %c0_i32_1 = arith.constant 0 : i32
    %c0_i32_2 = arith.constant 0 : i32
    return %arg0, %c0_i32, %c0_i32_0, %c0_i32_1 : i32, i32, i32, i32
  }
}

</mosaic_0001>

<llo_original>
// kernel: tpu_custom_call.1
$region0: #{tpu_custom_call.1}
  #allocation0 [shape = 'u32[]', space=smem, size = 0x4, offset = 0x4, fixed_abs, tag = 'smem constant byte address 0x4 - core index']
  #allocation1 [shape = 'u32[144,128]{1,0:T(1,128)}', space=vmem, size = 0x12000, scoped, tag = 'internal scratch']
  %s0 = inlined_call_operand.hbm [shape: f32[8,256], index: 0, kind: input, shape index: {}]
  %s1 = inlined_call_operand.hbm [shape: f32[8,256], index: 1, kind: input, shape index: {}]
  %s2 = inlined_call_operand.vmem [shape: f32[1,256], index: 2, kind: input, shape index: {}]
  %s3 = inlined_call_operand.vmem [shape: f32[1,256], index: 3, kind: input, shape index: {}]
  %s4 = inlined_call_operand.hbm [shape: f32[1,2,8,128], index: 4, kind: output, shape index: {}]
  %s5 = sld [smem:[#allocation0]]
  $region34: #{tpu_custom_call.1} parent=0
    _
  %s7 = ssub.s32 1, %s5
  %s8 = scalar_select 0, %s7, %s5
  $region1: #{tpu_custom_call.1} parent=0
    #allocation2 [shape = 'u8[8192]{0}', space=vmem, size = 0x2000, scoped, tag = 'input window, operand 0, single buffered']
    #allocation3 [shape = 's32[1]{0}', space=sflag, size = 0x4, scoped, tag = 'scoped memory for tpu_custom_call.1']
    #allocation4 [shape = 's32[1]{0}', space=sflag, size = 0x4, scoped, tag = 'scoped memory for tpu_custom_call.1']
    #allocation5 [shape = 'u8[8192]{0}', space=vmem, size = 0x2000, scoped, tag = 'input window, operand 1, single buffered']
    #allocation6 [shape = 's32[1]{0}', space=sflag, size = 0x4, scoped, tag = 'scoped memory for tpu_custom_call.1']
    #allocation7 [shape = 'u8[8192]{0}', space=vmem, size = 0x2000, scoped, tag = 'output window, operand 0, single buffered']
    %9 = vsyncpa [#allocation3], 0
    %10 = vsyncpa [#allocation6], 0
    %11 = vsyncpa [#allocation4], 0
    // Predicated region
    $region2: #{tpu_custom_call.1} parent=1 // pred_check
      _
    $region3: #{tpu_custom_call.1} parent=1 // pred_check_branch
      %13 = sbr.rel (0) target = $region5
    $region4: #{tpu_custom_call.1} parent=1 // pred_region
      %s15 = ssub.s32 256, 256
      %16 = vsyncadd [#allocation3], %s15
      %s18 = sshll.u32 [#allocation2], 4
      %s19 = int_to_ptr.vmem [resolvable:$true] %s18
      %21 = dma.hbm_to_vmem [thread:$0]  %s0, 256, %s19, [#allocation3]
    $region5: #{tpu_custom_call.1} parent=1 // pred_fallthru
      _
    // Predicated region
    $region6: #{tpu_custom_call.1} parent=1 // pred_check
      _
    $region7: #{tpu_custom_call.1} parent=1 // pred_check_branch
      %23 = sbr.rel (0) target = $region9
    $region8: #{tpu_custom_call.1} parent=1 // pred_region
      %s25 = ssub.s32 256, 256
      %26 = vsyncadd [#allocation6], %s25
      %s28 = sshll.u32 [#allocation5], 4
      %s29 = int_to_ptr.vmem [resolvable:$true] %s28
      %31 = dma.hbm_to_vmem [thread:$0]  %s1, 256, %s29, [#allocation6]
    $region9: #{tpu_custom_call.1} parent=1 // pred_fallthru
      _
    // Predicated region
    $region10: #{tpu_custom_call.1} parent=1 // pred_check
      _
    $region11: #{tpu_custom_call.1} parent=1 // pred_check_branch
      %33 = sbr.rel (0) target = $region13
    $region12: #{tpu_custom_call.1} parent=1 // pred_region
      _
    $region13: #{tpu_custom_call.1} parent=1 // pred_fallthru
      _
    // Predicated region
    $region14: #{tpu_custom_call.1} parent=1 // pred_check
      _
    $region15: #{tpu_custom_call.1} parent=1 // pred_check_branch
      %35 = sbr.rel (0) target = $region17
    $region16: #{tpu_custom_call.1} parent=1 // pred_region
      _
    $region17: #{tpu_custom_call.1} parent=1 // pred_fallthru
      _
    // Predicated region
    $region18: #{tpu_custom_call.1} parent=1 // pred_check
      _
    $region19: #{tpu_custom_call.1} parent=1 // pred_check_branch
      %37 = sbr.rel (0) target = $region21
    $region20: #{tpu_custom_call.1} parent=1 // pred_region
      %38 = dma.done [#allocation3], 256
    $region21: #{tpu_custom_call.1} parent=1 // pred_fallthru
      _
    // Predicated region
    $region22: #{tpu_custom_call.1} parent=1 // pred_check
      _
    $region23: #{tpu_custom_call.1} parent=1 // pred_check_branch
      %40 = sbr.rel (0) target = $region25
    $region24: #{tpu_custom_call.1} parent=1 // pred_region
      %41 = dma.done [#allocation6], 256
    $region25: #{tpu_custom_call.1} parent=1 // pred_fallthru
      _
    %v42 = vld [vmem:[#allocation2] sm:$0xff]
    %v43 = vld [vmem:[#allocation2 + $0x8] sm:$0xff]
    %v44 = vld [vmem:[#allocation5] sm:$0xff]
    %v45 = vld [vmem:[#allocation5 + $0x8] sm:$0xff]
    %v46 = vsub.f32 %v42, %v44
    %v47 = vsub.f32 %v43, %v45
    %48 = vrot.lane.b32.xlu0 %v46, 112
    %v49 = vpop.permute.xlu0 %48
    %50 = vrot.lane.b32.xlu0 %v47, 112
    %v51 = vpop.permute.xlu0 %50
    %v52 = vlaneseq
    %v53 = vand.u32 %v52, 127
    %vm54 = vcmp.lt.s32.totalorder %v53, 112
    %v55 = vsel %vm54, %v49, %v51
    %v56 = vsel %vm54, %v51, %v49
    %v57 = vsub.f32 %v55, %v46
    %v58 = vsub.f32 %v56, %v47
    %v59 = vand.u32 2147483647, %v57
    %v60 = vand.u32 2147483647, %v58
    %v61 = vld [vmem:[%s2] sm:$0x3]
    %v63 = vlaneseq
    %v64 = vshrl.u32 %v63, 7
    %v65 = vsub.s32 0, %v64
    %v66 = vrot.slane %v61, %v65
    %v67 = vlaneseq
    %v68 = vshrl.u32 %v67, 7
    %v69 = vsub.s32 1, %v68
    %v70 = vrot.slane %v61, %v69
    %v73 = vmul.f32 %v59, %v66
    %v74 = vmul.f32 %v60, %v70
    %v75 = vadd.f32 %v73, %v74
    %76 = vadd.xlane.f32.xlu0 %v75
    %v77 = vpop.xlane.xlu0 %76
    %v78 = vrot.slane %v77, 4
    %v79 = vadd.f32 %v77, %v78
    %v80 = vrot.slane %v79, 2
    %v81 = vadd.f32 %v79, %v80
    %v82 = vrot.slane %v81, 1
    %v83 = vadd.f32 %v81, %v82
    %s84 = vtos %v83
    %85 = vrot.lane.b32.xlu0 %v46, 127
    %v86 = vpop.permute.xlu0 %85
    %87 = vrot.lane.b32.xlu0 %v47, 127
    %v88 = vpop.permute.xlu0 %87
    %vm89 = vcmp.lt.s32.totalorder %v53, 127
    %v90 = vsel %vm89, %v86, %v88
    %v91 = vsel %vm89, %v88, %v86
    %v92 = vsub.f32 %v90, %v46
    %v93 = vsub.f32 %v91, %v47
    %v94 = vand.u32 2147483647, %v92
    %v95 = vand.u32 2147483647, %v93
    %v96 = vld [vmem:[%s3] sm:$0x3]
    %v98 = vlaneseq
    %v99 = vshrl.u32 %v98, 7
    %v100 = vsub.s32 0, %v99
    %v101 = vrot.slane %v96, %v100
    %v102 = vlaneseq
    %v103 = vshrl.u32 %v102, 7
    %v104 = vsub.s32 1, %v103
    %v105 = vrot.slane %v96, %v104
    %v108 = vmul.f32 %v94, %v101
    %v109 = vmul.f32 %v95, %v105
    %v110 = vadd.f32 %v108, %v109
    %111 = vadd.xlane.f32.xlu0 %v110
    %v112 = vpop.xlane.xlu0 %111
    %v113 = vrot.slane %v112, 4
    %v114 = vadd.f32 %v112, %v113
    %v115 = vrot.slane %v114, 2
    %v116 = vadd.f32 %v114, %v115
    %v117 = vrot.slane %v116, 1
    %v118 = vadd.f32 %v116, %v117
    %s119 = vtos %v118
    %v120 = vstv %s84
    %121 = vst [vmem:[#allocation7] sm:$0xff] %v120
    %v122 = vstv %s119
    %s123 = scalar_lea.vmem [#allocation7], 8
    %124 = vst [vmem:[%s123] sm:$0xff] %v122
    // Predicated region
    $region26: #{tpu_custom_call.1} parent=1 // pred_check
      _
    $region27: #{tpu_custom_call.1} parent=1 // pred_check_branch
      %126 = sbr.rel (0) target = $region29
    $region28: #{tpu_custom_call.1} parent=1 // pred_region
      %s128 = ssub.s32 256, 256
      %129 = vsyncadd [#allocation4], %s128
      %s130 = sshll.u32 [#allocation7], 4
      %s131 = int_to_ptr.vmem [resolvable:$true] %s130
      %136 = dma.vmem_to_hbm [thread:$0]  %s131, 256, %s4, [#allocation4], 128, 128, 8
    $region29: #{tpu_custom_call.1} parent=1 // pred_fallthru
      _
    // Predicated region
    $region30: #{tpu_custom_call.1} parent=1 // pred_check
      _
    $region31: #{tpu_custom_call.1} parent=1 // pred_check_branch
      %138 = sbr.rel (0) target = $region33
    $region32: #{tpu_custom_call.1} parent=1 // pred_region
      %139 = dma.done [#allocation4], 256
    $region33: #{tpu_custom_call.1} parent=1 // pred_fallthru
      _
    %140 = vsyncpa [#allocation3], 1
    %141 = vsyncpa [#allocation6], 1
    %142 = vsyncpa [#allocation4], 1

</llo_original>
